<compile_context>
chip_gen: v6e
topology: v6e:2x2x1
jax: 0.10.0
libtpu: 0.0.40
codegen_flags: <defaults>
</compile_context>

<pallas_src>
import math

import jax
import jax.numpy as jnp
from jax.experimental import pallas as pl
from jax.experimental.pallas import tpu as pltpu


def _rope_kernel(x_ref, cos_ref, sin_ref, o_ref):
    # x_ref / o_ref block: (tile_r, tile_l); cos_ref / sin_ref block: (1, tile_l) f32.
    x = x_ref[...].astype(jnp.float32)
    tl = x.shape[-1]

    # Both lane neighbours (XLU lane rotations within the tile).
    r_a = pltpu.roll(x, shift=1, axis=1)
    r_b = pltpu.roll(x, shift=tl - 1, axis=1)

    # Per-lane: which rotation holds the RoPE partner (lane ^ 1)?  Decided with
    # a single-row iota + single-row roll, so the result is correct regardless
    # of the rotate direction convention at negligible cost (one vreg row).
    lane = jax.lax.broadcasted_iota(jnp.int32, (1, tl), 1)
    a_src = pltpu.roll(lane, shift=1, axis=1)        # source lane index held by r_a
    use_a = a_src == (lane ^ 1)                      # (1, tl), broadcast over rows
    swapped = jnp.where(use_a, r_a, r_b)             # swapped[:, l] == x[:, l ^ 1]

    o_ref[...] = (x * cos_ref[...] + swapped * sin_ref[...]).astype(o_ref.dtype)


def rotary_positional_embedding(x, *, model_dim=None):
    """Apply interleaved RoPE to x of shape (B, H, T, D); D == model_dim (even)."""
    B, H, T, D = x.shape
    if model_dim is None:
        model_dim = D
    assert D == model_dim and D % 2 == 0, (D, model_dim)
    N = B * H
    L = T * D
    itemsize = jnp.dtype(x.dtype).itemsize

    # --- tiny angle tables, computed once outside the kernel ------------------
    t = jnp.arange(T, dtype=jnp.float32)[:, None]                    # (T, 1)
    d = jnp.arange(D // 2, dtype=jnp.float32)[None, :]               # (1, D/2)
    theta = t / jnp.exp((2.0 * d / float(D)) * math.log(10000.0))    # (T, D/2)
    cos_tab = jnp.repeat(jnp.cos(theta), 2, axis=-1)                 # (T, D), pair-duplicated
    sign = jnp.where(jnp.arange(D) % 2 == 0, -1.0, 1.0).astype(jnp.float32)
    sin_tab = jnp.repeat(jnp.sin(theta), 2, axis=-1) * sign[None, :]  # -sin even, +sin odd
    cos_flat = cos_tab.reshape(1, L)
    sin_flat = sin_tab.reshape(1, L)

    # --- lane-dense 2-D layout: rows = B*H, lanes = T*D -----------------------
    x2 = x.reshape(N, L)   # free reshape (row-major trailing-dim merge)

    # --- tiling ---------------------------------------------------------------
    sub = 16 if itemsize < 4 else 8          # sublane packing of x's dtype
    max_elems = 256 * 1024                   # ~1 MiB of f32 per streaming block

    # Lane tile: multiple of 128 lanes (and even, so RoPE pairs never straddle
    # a block edge).  Fall back to the full dim if L is not a multiple of 128.
    if L % 128 == 0:
        tile_l = min(L, 2048)
    else:
        tile_l = L   # TODO(synk): could pad L to a multiple of 128 for huge ragged T*D.

    # Row tile: multiple of the sublane packing; remainders are handled by
    # cdiv partial blocks (never collapse to one unbounded block).
    if N <= sub:
        tile_r = N
    else:
        rows_budget = max(sub, (max_elems // tile_l) // sub * sub)
        tile_r = min(N // sub * sub, rows_budget)

    grid = (pl.cdiv(L, tile_l), pl.cdiv(N, tile_r))   # lane tiles OUTER, row tiles INNER

    cost = pl.CostEstimate(
        flops=4 * N * L,
        transcendentals=0,
        bytes_accessed=2 * N * L * itemsize + 2 * L * 4,
    )

    out2 = pl.pallas_call(
        _rope_kernel,
        out_shape=jax.ShapeDtypeStruct((N, L), x.dtype),
        grid=grid,
        in_specs=[
            pl.BlockSpec((tile_r, tile_l), lambda j, i: (i, j)),   # x rows/lanes
            pl.BlockSpec((1, tile_l), lambda j, i: (0, j)),        # cos (per lane stripe)
            pl.BlockSpec((1, tile_l), lambda j, i: (0, j)),        # signed sin
        ],
        out_specs=pl.BlockSpec((tile_r, tile_l), lambda j, i: (i, j)),
        compiler_params=pltpu.CompilerParams(
            dimension_semantics=("parallel", "parallel"),
        ),
        cost_estimate=cost,
    )(x2, cos_flat, sin_flat)
    return out2.reshape(B, H, T, D)


if __name__ == "__main__":
    batch, heads, seq, model_dim = 2, 4, 8, 32

    key = jax.random.PRNGKey(0)
    x = jax.random.normal(key, (batch, heads, seq, model_dim), dtype=jnp.float32)

    out = rotary_positional_embedding(x, model_dim=model_dim)
    out = jax.block_until_ready(out)

    # Pure-JAX reference mirroring the PyTorch module.
    pos = jnp.arange(seq, dtype=jnp.float32)[None, :, None]              # (1, T, 1)
    dim = jnp.arange(model_dim // 2, dtype=jnp.float32)[None, None, :]   # (1, 1, D/2)
    theta = pos / jnp.exp(2.0 * dim / model_dim * math.log(10000.0))     # (1, T, D/2)
    sin = jnp.sin(theta)[:, None]                                        # (1, 1, T, D/2)
    cos = jnp.cos(theta)[:, None]
    x1 = x[..., 0::2]
    x2 = x[..., 1::2]
    out1 = x1 * cos - x2 * sin
    out2 = x1 * sin + x2 * cos
    ref = jnp.stack([out1, out2], axis=-1).reshape(x.shape)

    assert out.shape == x.shape, out.shape
    assert out.dtype == x.dtype
    assert jnp.allclose(out, ref, atol=1e-5, rtol=1e-5), "mismatch vs reference"

    print("KERNEL_OK")
</pallas_src>

<mosaic_0001>
module attributes {stable_mosaic.version = 11 : i64} {
  func.func @_rope_kernel(%arg0: i32, %arg1: i32, %arg2: memref<8x256xf32, #tpu.memory_space<vmem>>, %arg3: memref<1x256xf32, #tpu.memory_space<vmem>>, %arg4: memref<1x256xf32, #tpu.memory_space<vmem>>, %arg5: memref<8x256xf32, #tpu.memory_space<vmem>>) attributes {dimension_semantics = [#tpu.dimension_semantics<parallel>, #tpu.dimension_semantics<parallel>], iteration_bounds = array<i64: 1, 1>, scalar_prefetch = 0 : i64, scratch_operands = 0 : i64, tpu.core_type = #tpu.core_type<tc>, window_params = [{transform_indices = @transform_0, window_bounds = array<i64: 8, 256>}, {transform_indices = @transform_1, window_bounds = array<i64: 1, 256>}, {transform_indices = @transform_2, window_bounds = array<i64: 1, 256>}, {transform_indices = @transform_3, window_bounds = array<i64: 8, 256>}]} {
    %c0 = arith.constant 0 : index
    %c0_0 = arith.constant 0 : index
    %0 = vector.load %arg2[%c0, %c0_0] : memref<8x256xf32, #tpu.memory_space<vmem>>, vector<8x256xf32>
    %c1_i32 = arith.constant 1 : i32
    %1 = tpu.dynamic_rotate %0 by %c1_i32 dim 1 : vector<8x256xf32>, i32 -> vector<8x256xf32>
    %c255_i32 = arith.constant 255 : i32
    %2 = tpu.dynamic_rotate %0 by %c255_i32 dim 1 : vector<8x256xf32>, i32 -> vector<8x256xf32>
    %3 = tpu.iota {dimensions = array<i32: 1>} : vector<1x256xi32>
    %c1_i32_1 = arith.constant 1 : i32
    %4 = tpu.dynamic_rotate %3 by %c1_i32_1 dim 1 : vector<1x256xi32>, i32 -> vector<1x256xi32>
    %c1_i32_2 = arith.constant 1 : i32
    %5 = vector.broadcast %c1_i32_2 : i32 to vector<1x256xi32>
    %6 = arith.xori %3, %5 : vector<1x256xi32>
    %7 = arith.cmpi eq, %4, %6 : vector<1x256xi32>
    %8 = vector.shape_cast %7 : vector<1x256xi1> to vector<1x256xi1>
    %9 = vector.broadcast %8 : vector<1x256xi1> to vector<8x256xi1>
    %10 = arith.select %9, %1, %2 : vector<8x256xi1>, vector<8x256xf32>
    %c0_3 = arith.constant 0 : index
    %c0_4 = arith.constant 0 : index
    %11 = vector.load %arg3[%c0_3, %c0_4] : memref<1x256xf32, #tpu.memory_space<vmem>>, vector<1x256xf32>
    %12 = vector.broadcast %11 : vector<1x256xf32> to vector<8x256xf32>
    %13 = arith.mulf %0, %12 : vector<8x256xf32>
    %c0_5 = arith.constant 0 : index
    %c0_6 = arith.constant 0 : index
    %14 = vector.load %arg4[%c0_5, %c0_6] : memref<1x256xf32, #tpu.memory_space<vmem>>, vector<1x256xf32>
    %15 = vector.broadcast %14 : vector<1x256xf32> to vector<8x256xf32>
    %16 = arith.mulf %10, %15 : vector<8x256xf32>
    %17 = arith.addf %13, %16 : vector<8x256xf32>
    %c0_7 = arith.constant 0 : index
    %c0_8 = arith.constant 0 : index
    %18 = vector.load %arg5[%c0_7, %c0_8] : memref<8x256xf32, #tpu.memory_space<vmem>>, vector<8x256xf32>
    tpu.vector_store %arg5[%c0_7, %c0_8], %17 {strides = array<i32>} : memref<8x256xf32, #tpu.memory_space<vmem>>, vector<8x256xf32>,
    return
  }
  func.func @transform_0(%arg0: i32, %arg1: i32) -> (i32, i32) {
    %c0_i32 = arith.constant 0 : i32
    return %arg1, %arg0 : i32, i32
  }
  func.func @transform_1(%arg0: i32, %arg1: i32) -> (i32, i32) {
    %c0_i32 = arith.constant 0 : i32
    %c0_i32_0 = arith.constant 0 : i32
    return %c0_i32, %arg0 : i32, i32
  }
  func.func @transform_2(%arg0: i32, %arg1: i32) -> (i32, i32) {
    %c0_i32 = arith.constant 0 : i32
    %c0_i32_0 = arith.constant 0 : i32
    return %c0_i32, %arg0 : i32, i32
  }
  func.func @transform_3(%arg0: i32, %arg1: i32) -> (i32, i32) {
    %c0_i32 = arith.constant 0 : i32
    return %arg1, %arg0 : i32, i32
  }
}

</mosaic_0001>

<llo_original>
// kernel: tpu_custom_call.1
$region0: #{tpu_custom_call.1}
  #allocation0 [shape = 'u32[]', space=smem, size = 0x4, offset = 0x4, fixed_abs, tag = 'smem constant byte address 0x4 - core index']
  #allocation1 [shape = 'u32[144,128]{1,0:T(1,128)}', space=vmem, size = 0x12000, scoped, tag = 'internal scratch']
  %s0 = inlined_call_operand.hbm [shape: f32[8,256], index: 0, kind: input, shape index: {}]
  %s1 = inlined_call_operand.hbm [shape: f32[1,256], index: 1, kind: input, shape index: {}]
  %s2 = inlined_call_operand.vmem [shape: f32[1,256], index: 2, kind: input, shape index: {}]
  %s3 = inlined_call_operand.hbm [shape: f32[8,256], index: 3, kind: output, shape index: {}]
  %s4 = sld [smem:[#allocation0]]
  $region30: #{tpu_custom_call.1} parent=0
    _
  %s6 = ssub.s32 1, %s4
  %s7 = scalar_select 0, %s6, %s4
  $region1: #{tpu_custom_call.1} parent=0
    #allocation2 [shape = 'u8[8192]{0}', space=vmem, size = 0x2000, scoped, tag = 'input window, operand 0, single buffered']
    #allocation3 [shape = 's32[1]{0}', space=sflag, size = 0x4, scoped, tag = 'scoped memory for tpu_custom_call.1']
    #allocation4 [shape = 's32[1]{0}', space=sflag, size = 0x4, scoped, tag = 'scoped memory for tpu_custom_call.1']
    #allocation5 [shape = 'u8[1024]{0}', space=vmem, size = 0x400, scoped, tag = 'input window, operand 1, single buffered']
    #allocation6 [shape = 's32[1]{0}', space=sflag, size = 0x4, scoped, tag = 'scoped memory for tpu_custom_call.1']
    #allocation7 [shape = 'u8[8192]{0}', space=vmem, size = 0x2000, scoped, tag = 'output window, operand 0, single buffered']
    %8 = vsyncpa [#allocation3], 0
    %9 = vsyncpa [#allocation6], 0
    %10 = vsyncpa [#allocation4], 0
    // Predicated region
    $region2: #{tpu_custom_call.1} parent=1 // pred_check
      _
    $region3: #{tpu_custom_call.1} parent=1 // pred_check_branch
      %12 = sbr.rel (0) target = $region5
    $region4: #{tpu_custom_call.1} parent=1 // pred_region
      %s14 = ssub.s32 256, 256
      %15 = vsyncadd [#allocation3], %s14
      %s17 = sshll.u32 [#allocation2], 4
      %s18 = int_to_ptr.vmem [resolvable:$true] %s17
      %20 = dma.hbm_to_vmem [thread:$0]  %s0, 256, %s18, [#allocation3]
    $region5: #{tpu_custom_call.1} parent=1 // pred_fallthru
      _
    // Predicated region
    $region6: #{tpu_custom_call.1} parent=1 // pred_check
      _
    $region7: #{tpu_custom_call.1} parent=1 // pred_check_branch
      %22 = sbr.rel (0) target = $region9
    $region8: #{tpu_custom_call.1} parent=1 // pred_region
      %s24 = ssub.s32 32, 32
      %25 = vsyncadd [#allocation6], %s24
      %s27 = sshll.u32 [#allocation5], 4
      %s28 = int_to_ptr.vmem [resolvable:$true] %s27
      %30 = dma.hbm_to_vmem [thread:$0]  %s1, 32, %s28, [#allocation6]
    $region9: #{tpu_custom_call.1} parent=1 // pred_fallthru
      _
    // Predicated region
    $region10: #{tpu_custom_call.1} parent=1 // pred_check
      _
    $region11: #{tpu_custom_call.1} parent=1 // pred_check_branch
      %32 = sbr.rel (0) target = $region13
    $region12: #{tpu_custom_call.1} parent=1 // pred_region
      _
    $region13: #{tpu_custom_call.1} parent=1 // pred_fallthru
      _
    // Predicated region
    $region14: #{tpu_custom_call.1} parent=1 // pred_check
      _
    $region15: #{tpu_custom_call.1} parent=1 // pred_check_branch
      %34 = sbr.rel (0) target = $region17
    $region16: #{tpu_custom_call.1} parent=1 // pred_region
      %35 = dma.done [#allocation3], 256
    $region17: #{tpu_custom_call.1} parent=1 // pred_fallthru
      _
    // Predicated region
    $region18: #{tpu_custom_call.1} parent=1 // pred_check
      _
    $region19: #{tpu_custom_call.1} parent=1 // pred_check_branch
      %37 = sbr.rel (0) target = $region21
    $region20: #{tpu_custom_call.1} parent=1 // pred_region
      %38 = dma.done [#allocation6], 32
    $region21: #{tpu_custom_call.1} parent=1 // pred_fallthru
      _
    %v39 = vld [vmem:[#allocation2] sm:$0xff]
    %v40 = vld [vmem:[#allocation2 + $0x8] sm:$0xff]
    %41 = vrot.lane.b32.xlu0 %v39, 1
    %v42 = vpop.permute.xlu0 %41
    %43 = vrot.lane.b32.xlu0 %v40, 1
    %v44 = vpop.permute.xlu0 %43
    %v45 = vlaneseq
    %v46 = vand.u32 %v45, 127
    %vm47 = vcmp.lt.s32.totalorder %v46, 1
    %v48 = vsel %vm47, %v42, %v44
    %v49 = vsel %vm47, %v44, %v42
    %50 = vrot.lane.b32.xlu0 %v39, 127
    %v51 = vpop.permute.xlu0 %50
    %52 = vrot.lane.b32.xlu0 %v40, 127
    %v53 = vpop.permute.xlu0 %52
    %vm54 = vcmp.lt.s32.totalorder %v46, 127
    %v55 = vsel %vm54, %v51, %v53
    %v56 = vsel %vm54, %v53, %v51
    %v57 = vadd.s32 %v46, 128
    %58 = vrot.lane.b32.xlu0 %v46, 1
    %v59 = vpop.permute.xlu0 %58
    %60 = vrot.lane.b32.xlu0 %v57, 1
    %v61 = vpop.permute.xlu0 %60
    %v62 = vsel %vm47, %v59, %v61
    %v63 = vsel %vm47, %v61, %v59
    %v64 = vxor.u32 %v46, 1
    %v65 = vxor.u32 %v57, 1
    %vm66 = vcmp.eq.s32.totalorder %v63, %v64
    %vm67 = vcmp.eq.s32.totalorder %v62, %v65
    %v68 = vsel %vm66, 1, 0
    %v69 = vsel %vm67, 1, 0
    %v70 = vlaneseq
    %v71 = vshrl.u32 %v70, 7
    %v72 = vsub.s32 0, %v71
    %v73 = vrot.slane %v68, %v72
    %v74 = vlaneseq
    %v75 = vshrl.u32 %v74, 7
    %v76 = vsub.s32 0, %v75
    %v77 = vrot.slane %v69, %v76
    %vm78 = vcmp.eq.s32.totalorder %v73, 1
    %vm79 = vcmp.eq.s32.totalorder %v77, 1
    %v80 = vsel %vm78, %v49, %v55
    %v81 = vsel %vm79, %v48, %v56
    %v82 = vld [vmem:[#allocation5] sm:$0x3]
    %v84 = vlaneseq
    %v85 = vshrl.u32 %v84, 7
    %v86 = vsub.s32 0, %v85
    %v87 = vrot.slane %v82, %v86
    %v88 = vlaneseq
    %v89 = vshrl.u32 %v88, 7
    %v90 = vsub.s32 1, %v89
    %v91 = vrot.slane %v82, %v90
    %v94 = vmul.f32 %v39, %v87
    %v95 = vmul.f32 %v40, %v91
    %v96 = vld [vmem:[%s2] sm:$0x3]
    %v98 = vlaneseq
    %v99 = vshrl.u32 %v98, 7
    %v100 = vsub.s32 0, %v99
    %v101 = vrot.slane %v96, %v100
    %v102 = vlaneseq
    %v103 = vshrl.u32 %v102, 7
    %v104 = vsub.s32 1, %v103
    %v105 = vrot.slane %v96, %v104
    %v108 = vmul.f32 %v80, %v101
    %v109 = vmul.f32 %v81, %v105
    %v110 = vadd.f32 %v94, %v108
    %v111 = vadd.f32 %v95, %v109
    %112 = vst [vmem:[#allocation7] sm:$0xff] %v110
    %113 = vst [vmem:[#allocation7 + $0x8] sm:$0xff] %v111
    // Predicated region
    $region22: #{tpu_custom_call.1} parent=1 // pred_check
      _
    $region23: #{tpu_custom_call.1} parent=1 // pred_check_branch
      %115 = sbr.rel (0) target = $region25
    $region24: #{tpu_custom_call.1} parent=1 // pred_region
      %s117 = ssub.s32 256, 256
      %118 = vsyncadd [#allocation4], %s117
      %s120 = sshll.u32 [#allocation7], 4
      %s121 = int_to_ptr.vmem [resolvable:$true] %s120
      %123 = dma.vmem_to_hbm [thread:$0]  %s121, 256, %s3, [#allocation4]
    $region25: #{tpu_custom_call.1} parent=1 // pred_fallthru
      _
    // Predicated region
    $region26: #{tpu_custom_call.1} parent=1 // pred_check
      _
    $region27: #{tpu_custom_call.1} parent=1 // pred_check_branch
      %125 = sbr.rel (0) target = $region29
    $region28: #{tpu_custom_call.1} parent=1 // pred_region
      %126 = dma.done [#allocation4], 256
    $region29: #{tpu_custom_call.1} parent=1 // pred_fallthru
      _
    %127 = vsyncpa [#allocation3], 1
    %128 = vsyncpa [#allocation6], 1
    %129 = vsyncpa [#allocation4], 1

</llo_original>
